<compile_context>
chip_gen: v5e
topology: v5e:2x2
jax: 0.10.0
libtpu: 0.0.40
codegen_flags: <defaults>
</compile_context>

<pallas_src>
import jax
import jax.numpy as jnp
from jax.experimental import pallas as pl
from jax.experimental.pallas import tpu as pltpu

_NEG_BIG = -1e30  # finite "minus infinity" so fully-masked tiles never produce NaN


def _multi_attention_kernel(x_ref, vec_ref, len_ref, o_ref, m_scr, l_scr, acc_scr):
    """One grid step == one sequence tile (all batches, all heads).

    x_ref  : (B, tS, C) f32   current sequence tile (batch-first layout)
    vec_ref: (H, C)     f32   all head attention vectors (resident, constant)
    len_ref: (B, 1)     i32   sequence lengths
    o_ref  : (B, H, C)  f32   per-head contexts (written at the last tile)
    m_scr  : (B, H)     f32   running max      (online softmax)
    l_scr  : (B, H)     f32   running sum
    acc_scr: (B, H, C)  f32   running weighted sum of inputs
    """
    s_idx = pl.program_id(0)
    n_tiles = pl.num_programs(0)

    x = x_ref[...]                       # (B, tS, C)
    B, tS, C = x.shape
    H = vec_ref.shape[0]

    @pl.when(s_idx == 0)
    def _init():
        m_scr[...] = jnp.full(m_scr.shape, _NEG_BIG, dtype=jnp.float32)
        l_scr[...] = jnp.zeros(l_scr.shape, dtype=jnp.float32)
        acc_scr[...] = jnp.zeros(acc_scr.shape, dtype=jnp.float32)

    # logits[b, h, t] = sum_c vec[h, c] * x[b, t, c]   -- one MXU matmul for all heads
    vecs = jnp.broadcast_to(vec_ref[...], (B, H, C))            # (B, H, C)
    logits = jnp.einsum('bhc,btc->bht', vecs, x,
                        preferred_element_type=jnp.float32)     # (B, H, tS)

    # mask positions >= input_lengths[b]
    t_idx = jax.lax.broadcasted_iota(jnp.int32, (B, H, tS), 2) + s_idx * tS
    lens = len_ref[...]                                         # (B, 1) int32
    mask = t_idx < lens[:, :, None]                             # (B, H, tS)
    masked_logits = jnp.where(mask, logits, jnp.float32(_NEG_BIG))

    # online softmax update (max cancels exactly vs. the torch reference)
    m_prev = m_scr[...]                                         # (B, H)
    m_new = jnp.maximum(m_prev, jnp.max(masked_logits, axis=-1))
    alpha = jnp.exp(m_prev - m_new)                             # (B, H)
    p = jnp.exp(masked_logits - m_new[:, :, None])              # (B, H, tS)

    l_scr[...] = alpha * l_scr[...] + jnp.sum(p, axis=-1)
    # weighted sum of inputs for all heads -- second batched MXU contraction
    contrib = jnp.einsum('bht,btc->bhc', p, x,
                         preferred_element_type=jnp.float32)    # (B, H, C)
    acc_scr[...] = alpha[:, :, None] * acc_scr[...] + contrib
    m_scr[...] = m_new

    @pl.when(s_idx == n_tiles - 1)
    def _finalize():
        inv_l = pl.reciprocal(l_scr[...], approx=False)         # (B, H)
        o_ref[...] = (acc_scr[...] * inv_l[:, :, None]).astype(o_ref.dtype)


def _choose_seq_tile(S, max_tile=512):
    """Largest sequence tile <= max_tile that divides S and is sublane-aligned."""
    if S <= max_tile:
        return S
    for t in range(max_tile, 7, -1):
        if S % t == 0 and t % 8 == 0:
            return t
    return S  # fall back to a single full-sequence block


def multi_attention(inputs, input_lengths, attention_vectors):
    """
    inputs:            (S, B, C) float32   (seq_len, batch, chan) -- batch_first=False
    input_lengths:     (B,)      int
    attention_vectors: (H, C)    float32   (one vector per head)
    returns:           (B, H*C)  float32   == torch.cat(contexts, dim=1)
    """
    S, B, C = inputs.shape
    H = attention_vectors.shape[0]

    tile_s = _choose_seq_tile(S)
    n_tiles = S // tile_s

    # Batch-first layout so both contractions are leading-batch MXU matmuls and
    # the sequence tile keeps (tile_s, C) as the (sublane, lane) minor dims.
    xb = jnp.transpose(inputs, (1, 0, 2)).astype(jnp.float32)     # (B, S, C)
    vecs = attention_vectors.astype(jnp.float32)                  # (H, C)
    lens = input_lengths.reshape(B, 1).astype(jnp.int32)          # (B, 1)

    out = pl.pallas_call(
        _multi_attention_kernel,
        out_shape=jax.ShapeDtypeStruct((B, H, C), jnp.float32),
        grid_spec=pltpu.PrefetchScalarGridSpec(
            num_scalar_prefetch=0,
            grid=(n_tiles,),                                      # reduction over seq tiles
            in_specs=[
                pl.BlockSpec((B, tile_s, C), lambda s: (0, s, 0)),  # streamed seq tile
                pl.BlockSpec((H, C), lambda s: (0, 0)),             # head vectors (resident)
                pl.BlockSpec((B, 1), lambda s: (0, 0)),             # lengths (resident)
            ],
            out_specs=pl.BlockSpec((B, H, C), lambda s: (0, 0, 0)),  # accumulator output
            scratch_shapes=[
                pltpu.VMEM((B, H), jnp.float32),      # running max
                pltpu.VMEM((B, H), jnp.float32),      # running sum
                pltpu.VMEM((B, H, C), jnp.float32),   # running weighted accumulator
            ],
        ),
        compiler_params=pltpu.CompilerParams(
            dimension_semantics=("arbitrary",),        # sequence axis is a reduction
            vmem_limit_bytes=32 * 1024 * 1024,         # safe on v5e/v6e/v7x scoped budgets
        ),
    )(xb, vecs, lens)

    # (B, H, C) -> (B, H*C) is a free row-major reshape == torch.cat(contexts, dim=1)
    return out.reshape(B, H * C)


def _reference(inputs, input_lengths, attention_vectors):
    """Pure-JAX re-implementation of MultiAttention.forward for verification."""
    S, B, C = inputs.shape
    contexts = []
    for v in attention_vectors:
        logits = inputs @ v                                   # (S, B)
        unnorm = jnp.exp(logits - jnp.max(logits))
        idxes = jnp.arange(S)[:, None]                        # (S, 1)
        mask = (idxes < input_lengths[None, :]).astype(inputs.dtype)
        mw = unnorm * mask
        attn = mw / jnp.sum(mw, axis=0, keepdims=True)
        contexts.append(jnp.sum(inputs * attn[:, :, None], axis=0))  # (B, C)
    return jnp.concatenate(contexts, axis=1)


if __name__ == "__main__":
    key = jax.random.PRNGKey(0)
    k_x, k_v, k_len = jax.random.split(key, 3)

    S, B, C, H = 8, 2, 32, 2   # seq_len, batch, attention_size, heads

    inputs = jax.random.normal(k_x, (S, B, C), dtype=jnp.float32)
    # attention_vector.data.normal_(std=0.05) per head, deterministic
    attention_vectors = 0.05 * jax.random.normal(k_v, (H, C), dtype=jnp.float32)
    input_lengths = jax.random.randint(k_len, (B,), minval=3, maxval=S + 1,
                                       dtype=jnp.int32)

    out = multi_attention(inputs, input_lengths, attention_vectors)
    out = jax.block_until_ready(out)

    ref = _reference(inputs, input_lengths, attention_vectors)
    assert out.shape == (B, H * C)
    assert jnp.allclose(out, ref, atol=1e-5, rtol=1e-5), "mismatch vs reference"

    print("KERNEL_OK")
</pallas_src>

<mosaic_0001>
module attributes {stable_mosaic.version = 11 : i64} {
  func.func @_multi_attention_kernel(%arg0: i32, %arg1: memref<2x8x32xf32, #tpu.memory_space<vmem>>, %arg2: memref<2x32xf32, #tpu.memory_space<vmem>>, %arg3: memref<2x1xi32, #tpu.memory_space<vmem>>, %arg4: memref<2x2x32xf32, #tpu.memory_space<vmem>>, %arg5: memref<2x2xf32, #tpu.memory_space<vmem>>, %arg6: memref<2x2xf32, #tpu.memory_space<vmem>>, %arg7: memref<2x2x32xf32, #tpu.memory_space<vmem>>) attributes {dimension_semantics = [#tpu.dimension_semantics<arbitrary>], iteration_bounds = array<i64: 1>, scalar_prefetch = 0 : i64, scratch_operands = 3 : i64, tpu.core_type = #tpu.core_type<tc>, window_params = [{transform_indices = @transform_0, window_bounds = array<i64: 2, 8, 32>}, {pipeline_mode = #tpu.pipeline_mode<synchronous>, transform_indices = @transform_1, window_bounds = array<i64: 2, 32>}, {pipeline_mode = #tpu.pipeline_mode<synchronous>, transform_indices = @transform_2, window_bounds = array<i64: 2, 1>}, {pipeline_mode = #tpu.pipeline_mode<synchronous>, transform_indices = @transform_3, window_bounds = array<i64: 2, 2, 32>}]} {
    %c0 = arith.constant 0 : index
    %c0_0 = arith.constant 0 : index
    %c0_1 = arith.constant 0 : index
    %0 = vector.load %arg1[%c0, %c0_0, %c0_1] : memref<2x8x32xf32, #tpu.memory_space<vmem>>, vector<2x8x32xf32>
    %c0_i32 = arith.constant 0 : i32
    %1 = arith.cmpi eq, %arg0, %c0_i32 : i32
    %2 = arith.extui %1 : i1 to i32
    %c0_i32_2 = arith.constant 0 : i32
    %3 = arith.cmpi ne, %2, %c0_i32_2 : i32
    scf.if %3 {
      %cst_27 = arith.constant -1.000000e+30 : f32
      %43 = vector.broadcast %cst_27 : f32 to vector<2x2xf32>
      %c0_28 = arith.constant 0 : index
      %c0_29 = arith.constant 0 : index
      %44 = vector.load %arg5[%c0_28, %c0_29] : memref<2x2xf32, #tpu.memory_space<vmem>>, vector<2x2xf32>
      tpu.vector_store %arg5[%c0_28, %c0_29], %43 {strides = array<i32>} : memref<2x2xf32, #tpu.memory_space<vmem>>, vector<2x2xf32>,
      %cst_30 = arith.constant 0.000000e+00 : f32
      %45 = vector.broadcast %cst_30 : f32 to vector<2x2xf32>
      %c0_31 = arith.constant 0 : index
      %c0_32 = arith.constant 0 : index
      %46 = vector.load %arg6[%c0_31, %c0_32] : memref<2x2xf32, #tpu.memory_space<vmem>>, vector<2x2xf32>
      tpu.vector_store %arg6[%c0_31, %c0_32], %45 {strides = array<i32>} : memref<2x2xf32, #tpu.memory_space<vmem>>, vector<2x2xf32>,
      %cst_33 = arith.constant 0.000000e+00 : f32
      %47 = vector.broadcast %cst_33 : f32 to vector<2x2x32xf32>
      %c0_34 = arith.constant 0 : index
      %c0_35 = arith.constant 0 : index
      %c0_36 = arith.constant 0 : index
      %48 = vector.load %arg7[%c0_34, %c0_35, %c0_36] : memref<2x2x32xf32, #tpu.memory_space<vmem>>, vector<2x2x32xf32>
      tpu.vector_store %arg7[%c0_34, %c0_35, %c0_36], %47 {strides = array<i32>} : memref<2x2x32xf32, #tpu.memory_space<vmem>>, vector<2x2x32xf32>,
    } else {
    }
    %c0_3 = arith.constant 0 : index
    %c0_4 = arith.constant 0 : index
    %4 = vector.load %arg2[%c0_3, %c0_4] : memref<2x32xf32, #tpu.memory_space<vmem>>, vector<2x32xf32>
    %5 = vector.shape_cast %4 : vector<2x32xf32> to vector<1x2x32xf32>
    %6 = vector.broadcast %5 : vector<1x2x32xf32> to vector<2x2x32xf32>
    "tpu.trace_start"() <{level = 10 : i32, message = "bhc,btc->bht"}> : () -> ()
    %cst = arith.constant dense<0.000000e+00> : vector<2x2x8xf32>
    %7 = tpu.matmul %6, %0, %cst {dimension_numbers = #tpu.dot_dimension_numbers<[2], [2], [1], [1], [0, 0, 0, 1, 1, 1], [0], [0]>} : vector<2x2x32xf32>, vector<2x8x32xf32>, vector<2x2x8xf32> -> vector<2x2x8xf32>
    "tpu.trace_stop"() : () -> ()
    %8 = tpu.iota {dimensions = array<i32: 2>} : vector<2x2x8xi32>
    %c8_i32 = arith.constant 8 : i32
    %9 = arith.muli %arg0, %c8_i32 : i32
    %10 = vector.broadcast %9 : i32 to vector<2x2x8xi32>
    %11 = arith.addi %8, %10 : vector<2x2x8xi32>
    %c0_5 = arith.constant 0 : index
    %c0_6 = arith.constant 0 : index
    %12 = vector.load %arg3[%c0_5, %c0_6] : memref<2x1xi32, #tpu.memory_space<vmem>>, vector<2x1xi32>
    %13 = vector.shape_cast %12 : vector<2x1xi32> to vector<2x1x1xi32>
    %14 = vector.broadcast %13 : vector<2x1x1xi32> to vector<2x2x8xi32>
    %15 = arith.cmpi slt, %11, %14 : vector<2x2x8xi32>
    %cst_7 = arith.constant -1.000000e+30 : f32
    %16 = vector.broadcast %cst_7 : f32 to vector<2x2x8xf32>
    %17 = arith.select %15, %7, %16 : vector<2x2x8xi1>, vector<2x2x8xf32>
    %c0_8 = arith.constant 0 : index
    %c0_9 = arith.constant 0 : index
    %18 = vector.load %arg5[%c0_8, %c0_9] : memref<2x2xf32, #tpu.memory_space<vmem>>, vector<2x2xf32>
    %cst_10 = arith.constant dense<0xFF800000> : vector<2x2xf32>
    %19 = vector.multi_reduction <maximumf>, %17, %cst_10 [2] : vector<2x2x8xf32> to vector<2x2xf32>
    %20 = arith.maximumf %18, %19 : vector<2x2xf32>
    %21 = arith.subf %18, %20 : vector<2x2xf32>
    %22 = math.exp %21 : vector<2x2xf32>
    %23 = vector.shape_cast %20 : vector<2x2xf32> to vector<2x2x1xf32>
    %24 = vector.broadcast %23 : vector<2x2x1xf32> to vector<2x2x8xf32>
    %25 = arith.subf %17, %24 : vector<2x2x8xf32>
    %26 = math.exp %25 : vector<2x2x8xf32>
    %c0_11 = arith.constant 0 : index
    %c0_12 = arith.constant 0 : index
    %27 = vector.load %arg6[%c0_11, %c0_12] : memref<2x2xf32, #tpu.memory_space<vmem>>, vector<2x2xf32>
    %28 = arith.mulf %22, %27 : vector<2x2xf32>
    %cst_13 = arith.constant dense<0.000000e+00> : vector<2x2xf32>
    %29 = vector.multi_reduction <add>, %26, %cst_13 [2] : vector<2x2x8xf32> to vector<2x2xf32>
    %30 = arith.addf %28, %29 : vector<2x2xf32>
    %c0_14 = arith.constant 0 : index
    %c0_15 = arith.constant 0 : index
    %31 = vector.load %arg6[%c0_14, %c0_15] : memref<2x2xf32, #tpu.memory_space<vmem>>, vector<2x2xf32>
    tpu.vector_store %arg6[%c0_14, %c0_15], %30 {strides = array<i32>} : memref<2x2xf32, #tpu.memory_space<vmem>>, vector<2x2xf32>,
    "tpu.trace_start"() <{level = 10 : i32, message = "bht,btc->bhc"}> : () -> ()
    %cst_16 = arith.constant dense<0.000000e+00> : vector<2x2x32xf32>
    %32 = tpu.matmul %26, %0, %cst_16 {dimension_numbers = #tpu.dot_dimension_numbers<[2], [1], [1], [2], [0, 0, 0, 1, 1, 2], [0], [0]>} : vector<2x2x8xf32>, vector<2x8x32xf32>, vector<2x2x32xf32> -> vector<2x2x32xf32>
    "tpu.trace_stop"() : () -> ()
    %33 = vector.shape_cast %22 : vector<2x2xf32> to vector<2x2x1xf32>
    %c0_17 = arith.constant 0 : index
    %c0_18 = arith.constant 0 : index
    %c0_19 = arith.constant 0 : index
    %34 = vector.load %arg7[%c0_17, %c0_18, %c0_19] : memref<2x2x32xf32, #tpu.memory_space<vmem>>, vector<2x2x32xf32>
    %35 = vector.broadcast %33 : vector<2x2x1xf32> to vector<2x2x32xf32>
    %36 = arith.mulf %35, %34 : vector<2x2x32xf32>
    %37 = arith.addf %36, %32 : vector<2x2x32xf32>
    %c0_20 = arith.constant 0 : index
    %c0_21 = arith.constant 0 : index
    %c0_22 = arith.constant 0 : index
    %38 = vector.load %arg7[%c0_20, %c0_21, %c0_22] : memref<2x2x32xf32, #tpu.memory_space<vmem>>, vector<2x2x32xf32>
    tpu.vector_store %arg7[%c0_20, %c0_21, %c0_22], %37 {strides = array<i32>} : memref<2x2x32xf32, #tpu.memory_space<vmem>>, vector<2x2x32xf32>,
    %c0_23 = arith.constant 0 : index
    %c0_24 = arith.constant 0 : index
    %39 = vector.load %arg5[%c0_23, %c0_24] : memref<2x2xf32, #tpu.memory_space<vmem>>, vector<2x2xf32>
    tpu.vector_store %arg5[%c0_23, %c0_24], %20 {strides = array<i32>} : memref<2x2xf32, #tpu.memory_space<vmem>>, vector<2x2xf32>,
    %c0_i32_25 = arith.constant 0 : i32
    %40 = arith.cmpi eq, %arg0, %c0_i32_25 : i32
    %41 = arith.extui %40 : i1 to i32
    %c0_i32_26 = arith.constant 0 : i32
    %42 = arith.cmpi ne, %41, %c0_i32_26 : i32
    scf.if %42 {
      %c0_27 = arith.constant 0 : index
      %c0_28 = arith.constant 0 : index
      %43 = vector.load %arg6[%c0_27, %c0_28] : memref<2x2xf32, #tpu.memory_space<vmem>>, vector<2x2xf32>
      %44 = tpu.reciprocal %43 : vector<2x2xf32> -> vector<2x2xf32>
      %c0_29 = arith.constant 0 : index
      %c0_30 = arith.constant 0 : index
      %c0_31 = arith.constant 0 : index
      %45 = vector.load %arg7[%c0_29, %c0_30, %c0_31] : memref<2x2x32xf32, #tpu.memory_space<vmem>>, vector<2x2x32xf32>
      %46 = vector.shape_cast %44 : vector<2x2xf32> to vector<2x2x1xf32>
      %47 = vector.broadcast %46 : vector<2x2x1xf32> to vector<2x2x32xf32>
      %48 = arith.mulf %45, %47 : vector<2x2x32xf32>
      %c0_32 = arith.constant 0 : index
      %c0_33 = arith.constant 0 : index
      %c0_34 = arith.constant 0 : index
      %49 = vector.load %arg4[%c0_32, %c0_33, %c0_34] : memref<2x2x32xf32, #tpu.memory_space<vmem>>, vector<2x2x32xf32>
      tpu.vector_store %arg4[%c0_32, %c0_33, %c0_34], %48 {strides = array<i32>} : memref<2x2x32xf32, #tpu.memory_space<vmem>>, vector<2x2x32xf32>,
    } else {
    }
    return
  }
  func.func @transform_0(%arg0: i32) -> (i32, i32, i32) {
    %c0_i32 = arith.constant 0 : i32
    %c0_i32_0 = arith.constant 0 : i32
    %c0_i32_1 = arith.constant 0 : i32
    return %c0_i32, %arg0, %c0_i32_0 : i32, i32, i32
  }
  func.func @transform_1(%arg0: i32) -> (i32, i32) {
    %c0_i32 = arith.constant 0 : i32
    %c0_i32_0 = arith.constant 0 : i32
    %c0_i32_1 = arith.constant 0 : i32
    return %c0_i32, %c0_i32_0 : i32, i32
  }
  func.func @transform_2(%arg0: i32) -> (i32, i32) {
    %c0_i32 = arith.constant 0 : i32
    %c0_i32_0 = arith.constant 0 : i32
    %c0_i32_1 = arith.constant 0 : i32
    return %c0_i32, %c0_i32_0 : i32, i32
  }
  func.func @transform_3(%arg0: i32) -> (i32, i32, i32) {
    %c0_i32 = arith.constant 0 : i32
    %c0_i32_0 = arith.constant 0 : i32
    %c0_i32_1 = arith.constant 0 : i32
    %c0_i32_2 = arith.constant 0 : i32
    return %c0_i32, %c0_i32_0, %c0_i32_1 : i32, i32, i32
  }
}

</mosaic_0001>

<llo_original>
// kernel: tpu_custom_call.1
$region0: #{tpu_custom_call.1}
  #allocation0 [shape = 'u32[]', space=smem, size = 0x4, offset = 0x4, fixed_abs, tag = 'smem constant byte address 0x4 - core index']
  #allocation1 [shape = 'u32[72,128]{1,0:T(1,128)}', space=vmem, size = 0x9000, scoped, tag = 'internal scratch']
  #allocation2 [shape = 'f32[2,2]{1,0:T(2,128)}', space=vmem, size = 0x400, scoped, tag = 'scratch operand']
  #allocation3 [shape = 'f32[2,2]{1,0:T(2,128)}', space=vmem, size = 0x400, scoped, tag = 'scratch operand']
  #allocation4 [shape = 'f32[2,2,32]{2,1,0:T(2,128)}', space=vmem, size = 0x800, scoped, tag = 'scratch operand']
  %s0 = inlined_call_operand.hbm [shape: f32[2,8,32], index: 0, kind: input, shape index: {}]
  %s1 = inlined_call_operand.vmem [shape: f32[2,32], index: 1, kind: input, shape index: {}]
  %s2 = inlined_call_operand.vmem [shape: s32[2,1], index: 2, kind: input, shape index: {}]
  %s3 = inlined_call_operand.hbm [shape: f32[2,2,32], index: 3, kind: output, shape index: {}]
  %s4 = sld [smem:[#allocation0]]
  $region34: #{tpu_custom_call.1} parent=0
    _
  %s6 = ssub.s32 1, %s4
  %s7 = scalar_select 0, %s6, %s4
  $region1: #{tpu_custom_call.1} parent=0
    #allocation5 [shape = 'u8[8192]{0}', space=vmem, size = 0x2000, scoped, tag = 'input window, operand 0, single buffered']
    #allocation6 [shape = 's32[1]{0}', space=sflag, size = 0x4, scoped, tag = 'scoped memory for tpu_custom_call.1']
    #allocation7 [shape = 's32[1]{0}', space=sflag, size = 0x4, scoped, tag = 'scoped memory for tpu_custom_call.1']
    #allocation8 [shape = 'u8[2048]{0}', space=vmem, size = 0x800, scoped, tag = 'output window, operand 0, single buffered']
    %8 = vsyncpa [#allocation6], 0
    %9 = vsyncpa [#allocation7], 0
    // Predicated region
    $region2: #{tpu_custom_call.1} parent=1 // pred_check
      _
    $region3: #{tpu_custom_call.1} parent=1 // pred_check_branch
      %11 = sbr.rel (0) target = $region5
    $region4: #{tpu_custom_call.1} parent=1 // pred_region
      %13 = vsyncadd [#allocation6], 0
      %s14 = sshll.u32 %s0, 4
      %s15 = int_to_ptr.hbm [resolvable:$true] %s14
      %s16 = sshll.u32 [#allocation5], 4
      %s17 = int_to_ptr.vmem [resolvable:$true] %s16
      %22 = dma.hbm_to_vmem [thread:$0]  %s15, 256, %s17, [#allocation6], 128, 128, 8
    $region5: #{tpu_custom_call.1} parent=1 // pred_fallthru
      _
    // Predicated region
    $region6: #{tpu_custom_call.1} parent=1 // pred_check
      _
    $region7: #{tpu_custom_call.1} parent=1 // pred_check_branch
      %24 = sbr.rel (0) target = $region9
    $region8: #{tpu_custom_call.1} parent=1 // pred_region
      _
    $region9: #{tpu_custom_call.1} parent=1 // pred_fallthru
      _
    // Predicated region
    $region10: #{tpu_custom_call.1} parent=1 // pred_check
      _
    $region11: #{tpu_custom_call.1} parent=1 // pred_check_branch
      %26 = sbr.rel (0) target = $region13
    $region12: #{tpu_custom_call.1} parent=1 // pred_region
      _
    $region13: #{tpu_custom_call.1} parent=1 // pred_fallthru
      _
    // Predicated region
    $region14: #{tpu_custom_call.1} parent=1 // pred_check
      _
    $region15: #{tpu_custom_call.1} parent=1 // pred_check_branch
      %28 = sbr.rel (0) target = $region17
    $region16: #{tpu_custom_call.1} parent=1 // pred_region
      %30 = dma.done [#allocation6], 256
    $region17: #{tpu_custom_call.1} parent=1 // pred_fallthru
      _
    %v31 = vld [vmem:[#allocation5] sm:$0xff]
    %v32 = vld [vmem:[#allocation5 + $0x8] sm:$0xff]
    %p33 = scmp.eq.s32.totalorder 0, 0
    // Predicated region
    $region18: #{tpu_custom_call.1} parent=1 // pred_check
      %p34 = pneg %p33
    $region19: #{tpu_custom_call.1} parent=1 // pred_check_branch
      %36 = sbr.rel (%p34) target = $region21
    $region20: #{tpu_custom_call.1} parent=1 // pred_region
      %vm37 = vcmask 9216
      %38 = vst.msk [vmem:[#allocation2] sm:$0x3] %vm37, -1e+30
      %39 = vst.msk [vmem:[#allocation3] sm:$0x3] %vm37, 0.0
      %vm40 = vcmask 254976
      %41 = vst.msk [vmem:[#allocation4] sm:$0x3] %vm40, 0.0
      %42 = vst.msk [vmem:[#allocation4 + $0x2] sm:$0x3] %vm40, 0.0
    $region21: #{tpu_custom_call.1} parent=1 // pred_fallthru
      _
    %v43 = vld [vmem:[%s1] sm:$0x3]
    %vm44 = vcmask 261120
    %v46 = vsel %vm44, %v43, 0
    %v49 = vsel %vm44, %v31, 0
    %51 = vmatpush.xpose.msra.mxu0 0.0
    %52 = vmatpush.xpose.msra.mxu0 0.0
    %53 = vmatpush.xpose.msra.mxu0 0.0
    %54 = vmatpush.xpose.msra.mxu0 0.0
    %55 = vmatpush.xpose.msra.mxu0 0.0
    %56 = vmatpush.xpose.msra.mxu0 0.0
    %57 = vmatpush.xpose.msra.mxu0 0.0
    %58 = vmatpush.xpose.msra.mxu0 0.0
    %59 = vmatpush.xpose.msra.mxu0 0.0
    %60 = vmatpush.xpose.msra.mxu0 0.0
    %61 = vmatpush.xpose.msra.mxu0 0.0
    %62 = vmatpush.xpose.msra.mxu0 0.0
    %63 = vmatpush.xpose.msra.mxu0 0.0
    %64 = vmatpush.xpose.msra.mxu0 0.0
    %65 = vmatpush.xpose.msra.mxu0 0.0
    %66 = vmatpush.xpose.msra.mxu0 %v49
    %67 = vmatmul.f32.gmra.mxu0 %v46
    %v68 = vpop.f32.mrf.mxu0
    %v69 = vadd.f32 0.0, %v68
    %70 = vdwg.mxu0
    %v72 = vsel %vm44, %v32, 0
    %74 = vmatpush.xpose.msra.mxu0 0.0
    %75 = vmatpush.xpose.msra.mxu0 0.0
    %76 = vmatpush.xpose.msra.mxu0 0.0
    %77 = vmatpush.xpose.msra.mxu0 0.0
    %78 = vmatpush.xpose.msra.mxu0 0.0
    %79 = vmatpush.xpose.msra.mxu0 0.0
    %80 = vmatpush.xpose.msra.mxu0 0.0
    %81 = vmatpush.xpose.msra.mxu0 0.0
    %82 = vmatpush.xpose.msra.mxu0 0.0
    %83 = vmatpush.xpose.msra.mxu0 0.0
    %84 = vmatpush.xpose.msra.mxu0 0.0
    %85 = vmatpush.xpose.msra.mxu0 0.0
    %86 = vmatpush.xpose.msra.mxu0 0.0
    %87 = vmatpush.xpose.msra.mxu0 0.0
    %88 = vmatpush.xpose.msra.mxu0 0.0
    %89 = vmatpush.xpose.msra.mxu0 %v72
    %90 = vmatmul.f32.gmra.mxu0 %v46
    %v91 = vpop.f32.mrf.mxu0
    %v92 = vadd.f32 0.0, %v91
    %93 = vdwg.mxu0
    %v94 = vlaneseq
    %v95 = vand.u32 %v94, 127
    %s96 = smul.u32 0, 8
    %v97 = vstv %s96
    %v98 = vadd.s32 %v95, %v97
    %v99 = vld [vmem:[%s2] sm:$0x3]
    %v100 = vrot.slane %v99, 1
    %v101 = vperm.slane %v99, 0
    %v102 = vperm.slane %v100, 0
    %103 = vset.pattern.permute.xlu0 0
    %104 = vperm.xlu0 %103, %v101
    %v105 = vpop.permute.xlu0 %104
    %106 = vset.pattern.permute.xlu0 0
    %107 = vperm.xlu0 %106, %v102
    %v108 = vpop.permute.xlu0 %107
    %vm109 = vcmp.lt.s32.totalorder %v98, %v105
    %vm110 = vcmp.lt.s32.totalorder %v98, %v108
    %v111 = vsel %vm109, %v69, -1e+30
    %v112 = vsel %vm110, %v92, -1e+30
    %v113 = vld [vmem:[#allocation2] sm:$0x3]
    %vm114 = vcmask 58368
    %v115 = vsel %vm114, %v111, -inf
    %116 = vmax.xlane.f32.xlu0 %v115
    %v117 = vpop.xlane.xlu0 %116
    %v118 = vsel %vm114, %v112, -inf
    %119 = vmax.xlane.f32.xlu0 %v118
    %v120 = vpop.xlane.xlu0 %119
    %v123 = vperm.slane %v117, %v95
    %v124 = vperm.slane %v120, %v95
    %vm125 = vcmask 1041409
    %v126 = vsel %vm125, %v124, %v123
    %v128 = vmax.f32 %v113, %v126
    %v129 = vsub.f32 %v113, %v128
    %v130 = vmul.f32 %v129, 1.442695
    %v131 = vpow.pop %v130
    %v132 = vperm.slane %v128, 0
    %v133 = vlaneseq
    %v134 = vshrl.u32 %v133, 7
    %136 = vset.pattern.permute.xlu0 %v134
    %137 = vperm.xlu0 %136, %v132
    %v138 = vpop.permute.xlu0 %137
    %v139 = vperm.slane %v128, 1
    %v140 = vlaneseq
    %v141 = vshrl.u32 %v140, 7
    %143 = vset.pattern.permute.xlu0 %v141
    %144 = vperm.xlu0 %143, %v139
    %v145 = vpop.permute.xlu0 %144
    %v146 = vsub.f32 %v111, %v138
    %v147 = vsub.f32 %v112, %v145
    %v148 = vmul.f32 %v146, 1.442695
    %v149 = vpow.pop %v148
    %v150 = vmul.f32 %v147, 1.442695
    %v151 = vpow.pop %v150
    %v152 = vld [vmem:[#allocation3] sm:$0x3]
    %v153 = vmul.f32 %v131, %v152
    %v154 = vsel %vm114, %v149, 0.0
    %155 = vadd.xlane.f32.xlu0 %v154
    %v156 = vpop.xlane.xlu0 %155
    %v157 = vsel %vm114, %v151, 0.0
    %158 = vadd.xlane.f32.xlu0 %v157
    %v159 = vpop.xlane.xlu0 %158
    %v162 = vperm.slane %v156, %v95
    %v163 = vperm.slane %v159, %v95
    %v164 = vsel %vm125, %v163, %v162
    %v166 = vadd.f32 %v153, %v164
    %vm167 = vcmask 9216
    %168 = vst.msk [vmem:[#allocation3] sm:$0x3] %vm167, %v166
    %vm169 = vcmask 64512
    %v171 = vsel %vm169, %v149, 0
    %173 = vmatpush.msra.mxu0 0.0
    %174 = vmatpush.msra.mxu0 0.0
    %175 = vmatpush.msra.mxu0 0.0
    %176 = vmatpush.msra.mxu0 0.0
    %177 = vmatpush.msra.mxu0 0.0
    %178 = vmatpush.msra.mxu0 0.0
    %179 = vmatpush.msra.mxu0 0.0
    %180 = vmatpush.msra.mxu0 0.0
    %181 = vmatpush.msra.mxu0 0.0
    %182 = vmatpush.msra.mxu0 0.0
    %183 = vmatpush.msra.mxu0 0.0
    %184 = vmatpush.msra.mxu0 0.0
    %185 = vmatpush.msra.mxu0 0.0
    %186 = vmatpush.msra.mxu0 0.0
    %187 = vmatpush.msra.mxu0 0.0
    %188 = vmatpush.msra.mxu0 %v31
    %189 = vmatmul.f32.gmra.mxu0 %v171
    %v190 = vpop.f32.mrf.mxu0
    %v191 = vadd.f32 0.0, %v190
    %192 = vdwg.mxu0
    %v194 = vsel %vm169, %v151, 0
    %196 = vmatpush.msra.mxu0 0.0
    %197 = vmatpush.msra.mxu0 0.0
    %198 = vmatpush.msra.mxu0 0.0
    %199 = vmatpush.msra.mxu0 0.0
    %200 = vmatpush.msra.mxu0 0.0
    %201 = vmatpush.msra.mxu0 0.0
    %202 = vmatpush.msra.mxu0 0.0
    %203 = vmatpush.msra.mxu0 0.0
    %204 = vmatpush.msra.mxu0 0.0
    %205 = vmatpush.msra.mxu0 0.0
    %206 = vmatpush.msra.mxu0 0.0
    %207 = vmatpush.msra.mxu0 0.0
    %208 = vmatpush.msra.mxu0 0.0
    %209 = vmatpush.msra.mxu0 0.0
    %210 = vmatpush.msra.mxu0 0.0
    %211 = vmatpush.msra.mxu0 %v32
    %212 = vmatmul.f32.gmra.mxu0 %v194
    %v213 = vpop.f32.mrf.mxu0
    %v214 = vadd.f32 0.0, %v213
    %215 = vdwg.mxu0
    %v216 = vperm.slane %v131, 0
    %v217 = vlaneseq
    %v218 = vshrl.u32 %v217, 7
    %220 = vset.pattern.permute.xlu0 %v218
    %221 = vperm.xlu0 %220, %v216
    %v222 = vpop.permute.xlu0 %221
    %v223 = vperm.slane %v131, 1
    %v224 = vlaneseq
    %v225 = vshrl.u32 %v224, 7
    %227 = vset.pattern.permute.xlu0 %v225
    %228 = vperm.xlu0 %227, %v223
    %v229 = vpop.permute.xlu0 %228
    %v230 = vld [vmem:[#allocation4] sm:$0x3]
    %v231 = vld [vmem:[#allocation4 + $0x2] sm:$0x3]
    %v232 = vmul.f32 %v222, %v230
    %v233 = vmul.f32 %v229, %v231
    %v234 = vadd.f32 %v232, %v191
    %v235 = vadd.f32 %v233, %v214
    %vm236 = vcmask 254976
    %237 = vst.msk [vmem:[#allocation4] sm:$0x3] %vm236, %v234
    %238 = vst.msk [vmem:[#allocation4 + $0x2] sm:$0x3] %vm236, %v235
    %239 = vst.msk [vmem:[#allocation2] sm:$0x3] %vm167, %v128
    // Predicated region
    $region22: #{tpu_custom_call.1} parent=1 // pred_check
      %p240 = pneg %p33
    $region23: #{tpu_custom_call.1} parent=1 // pred_check_branch
      %242 = sbr.rel (%p240) target = $region25
    $region24: #{tpu_custom_call.1} parent=1 // pred_region
      %v243 = vld [vmem:[#allocation3] sm:$0x3]
      %v244 = vrcp.pop %v243
      %v245 = vmul.f32 %v243, %v244
      %v246 = vsub.f32 1.0, %v245
      %v247 = vmul.f32 %v244, %v246
      %v248 = vadd.f32 %v244, %v247
      %vm249 = vweird.f32 %v243
      %vm250 = vweird.f32 %v244
      %vm251 = vmor %vm249, %vm250
      %v252 = vsel %vm251, %v244, %v248
      %v253 = vand.u32 2147483647, %v243
      %vm254 = vcmp.eq.f32.partialorder %v253, 8.507059e+37
      %v255 = vand.u32 %v243, 2147483648
      %v256 = vor.u32 1.1754944e-38, %v255
      %v257 = vsel %vm254, %v256, %v252
      %v258 = vld [vmem:[#allocation4] sm:$0x3]
      %v259 = vld [vmem:[#allocation4 + $0x2] sm:$0x3]
      %v260 = vperm.slane %v257, 0
      %v261 = vlaneseq
      %v262 = vshrl.u32 %v261, 7
      %264 = vset.pattern.permute.xlu0 %v262
      %265 = vperm.xlu0 %264, %v260
      %v266 = vpop.permute.xlu0 %265
      %v267 = vperm.slane %v257, 1
      %v268 = vlaneseq
      %v269 = vshrl.u32 %v268, 7
      %271 = vset.pattern.permute.xlu0 %v269
      %272 = vperm.xlu0 %271, %v267
      %v273 = vpop.permute.xlu0 %272
      %v274 = vmul.f32 %v258, %v266
      %v275 = vmul.f32 %v259, %v273
      %276 = vst.msk [vmem:[#allocation8] sm:$0x3] %vm236, %v274
      %277 = vst.msk [vmem:[#allocation8 + $0x2] sm:$0x3] %vm236, %v275
    $region25: #{tpu_custom_call.1} parent=1 // pred_fallthru
      _
    // Predicated region
    $region26: #{tpu_custom_call.1} parent=1 // pred_check
      _
    $region27: #{tpu_custom_call.1} parent=1 // pred_check_branch
      %279 = sbr.rel (0) target = $region29
    $region28: #{tpu_custom_call.1} parent=1 // pred_region
      %281 = vsyncadd [#allocation7], 0
      %s282 = sshll.u32 [#allocation8], 4
      %s283 = int_to_ptr.vmem [resolvable:$true] %s282
      %s284 = sshll.u32 %s3, 4
      %s285 = int_to_ptr.hbm [resolvable:$true] %s284
      %290 = dma.vmem_to_hbm [thread:$0]  %s283, 64, %s285, [#allocation7], 32, 32, 2
    $region29: #{tpu_custom_call.1} parent=1 // pred_fallthru
      _
    // Predicated region
    $region30: #{tpu_custom_call.1} parent=1 // pred_check
      _
    $region31: #{tpu_custom_call.1} parent=1 // pred_check_branch
      %292 = sbr.rel (0) target = $region33
    $region32: #{tpu_custom_call.1} parent=1 // pred_region
      %294 = dma.done [#allocation7], 64
    $region33: #{tpu_custom_call.1} parent=1 // pred_fallthru
      _
    %295 = vsyncpa [#allocation6], 1
    %296 = vsyncpa [#allocation7], 1

</llo_original>
